<compile_context>
chip_gen: v7x
topology: tpu7x:2x2x1
jax: 0.10.0
libtpu: 0.0.40
codegen_flags: <defaults>
</compile_context>

<pallas_src>
import functools

import jax
import jax.numpy as jnp
from jax.experimental import pallas as pl
from jax.experimental.pallas import tpu as pltpu

HIDDEN_IN = 1024
HIDDEN_MID = 128
NUM_CLASSES = 3
OUT_PAD = 128          # lane-dense padded classifier width
DEFAULT_TB = 512       # batch tile (rows); f32 x tile = 2 MiB, double-buffered 4 MiB


def _round_up(n, m):
    return ((n + m - 1) // m) * m


def fc1_kernel(x_ref, w1_ref, b1_ref, w2_ref, b2_ref, o_ref):
    # First matmul on the MXU in bf16 with f32 accumulation.
    x = x_ref[...].astype(jnp.bfloat16)          # (TB, 1024)
    h = jnp.dot(x, w1_ref[...], preferred_element_type=jnp.float32)  # (TB, 128)
    # Bias + ReLU in f32 on the VPU (lane-dense 128-wide).
    h = jnp.maximum(h + b1_ref[...], 0.0)
    # Second (tiny) matmul in f32; W2 is zero-padded to 128 output lanes.
    y = jnp.dot(h, w2_ref[...], preferred_element_type=jnp.float32)  # (TB, 128)
    o_ref[...] = (y + b2_ref[...]).astype(o_ref.dtype)


@functools.partial(jax.jit, static_argnames=("tb",))
def fc1_forward(x, w1_bf16, b1, w2, b2, *, tb=DEFAULT_TB):
    """x: (B, 1024) f32.  w1_bf16: (1024, 128) bf16.  b1: (1, 128) f32.
    w2: (128, NUM_CLASSES) f32.  b2: (1, NUM_CLASSES) f32.  Returns (B, NUM_CLASSES)."""
    B = x.shape[0]

    # Batch tile: multiple of 8 sublanes, capped at `tb`; pad B up to a tile multiple.
    TB = min(tb, _round_up(B, 8))
    Bp = _round_up(B, TB)
    if Bp != B:
        x = jnp.pad(x, ((0, Bp - B), (0, 0)))

    # Lane-dense classifier: pad N from NUM_CLASSES -> OUT_PAD with zeros.
    w2p = jnp.pad(w2, ((0, 0), (0, OUT_PAD - NUM_CLASSES)))
    b2p = jnp.pad(b2, ((0, 0), (0, OUT_PAD - NUM_CLASSES)))

    grid = (Bp // TB,)

    flops = 2 * Bp * (HIDDEN_IN * HIDDEN_MID + HIDDEN_MID * OUT_PAD)
    bytes_accessed = (
        Bp * HIDDEN_IN * 4                      # x (f32 in HBM)
        + HIDDEN_IN * HIDDEN_MID * 2            # W1 (bf16)
        + HIDDEN_MID * 4                        # b1
        + HIDDEN_MID * OUT_PAD * 4              # W2 (padded)
        + OUT_PAD * 4                           # b2 (padded)
        + Bp * OUT_PAD * 4                      # out
    )

    out_padded = pl.pallas_call(
        fc1_kernel,
        out_shape=jax.ShapeDtypeStruct((Bp, OUT_PAD), x.dtype),
        grid=grid,
        in_specs=[
            pl.BlockSpec((TB, HIDDEN_IN), lambda i: (i, 0)),        # x streams
            pl.BlockSpec((HIDDEN_IN, HIDDEN_MID), lambda i: (0, 0)),  # W1 resident
            pl.BlockSpec((1, HIDDEN_MID), lambda i: (0, 0)),          # b1 resident
            pl.BlockSpec((HIDDEN_MID, OUT_PAD), lambda i: (0, 0)),    # W2 resident
            pl.BlockSpec((1, OUT_PAD), lambda i: (0, 0)),             # b2 resident
        ],
        out_specs=pl.BlockSpec((TB, OUT_PAD), lambda i: (i, 0)),
        compiler_params=pltpu.CompilerParams(
            dimension_semantics=("parallel",),
        ),
        cost_estimate=pl.CostEstimate(
            flops=flops, transcendentals=0, bytes_accessed=bytes_accessed
        ),
    )(x, w1_bf16, b1, w2p, b2p)

    return out_padded[:B, :NUM_CLASSES]


def init_params(key):
    k1, k2, k3, k4 = jax.random.split(key, 4)
    # PyTorch-style uniform init; weights stored (in_features, out_features)
    # so the kernel computes y = x @ W + b directly on the MXU.
    bound1 = 1.0 / (HIDDEN_IN ** 0.5)
    w1 = jax.random.uniform(k1, (HIDDEN_IN, HIDDEN_MID), jnp.float32, -bound1, bound1)
    b1 = jax.random.uniform(k2, (1, HIDDEN_MID), jnp.float32, -bound1, bound1)
    bound2 = 1.0 / (HIDDEN_MID ** 0.5)
    w2 = jax.random.uniform(k3, (HIDDEN_MID, NUM_CLASSES), jnp.float32, -bound2, bound2)
    b2 = jax.random.uniform(k4, (1, NUM_CLASSES), jnp.float32, -bound2, bound2)
    # W1 stored as bf16: halves weight HBM bytes, native MXU dtype on v6e/v7x.
    return w1.astype(jnp.bfloat16), b1, w2, b2


def reference(x, w1_bf16, b1, w2, b2):
    # Matches the kernel's numerics (bf16 first matmul, f32 accumulation / elementwise).
    h = jnp.dot(x.astype(jnp.bfloat16), w1_bf16, preferred_element_type=jnp.float32)
    h = jnp.maximum(h + b1, 0.0)
    return jnp.dot(h, w2, preferred_element_type=jnp.float32) + b2


if __name__ == "__main__":
    key = jax.random.PRNGKey(0)
    kx, kp = jax.random.split(key)
    params = init_params(kp)

    # Small demo batches; 50 exercises the ragged-batch padding path.
    for B in (8, 50):
        x = jax.random.normal(jax.random.fold_in(kx, B), (B, HIDDEN_IN), jnp.float32)
        out = jax.block_until_ready(fc1_forward(x, *params))
        ref = jax.block_until_ready(reference(x, *params))
        assert out.shape == (B, NUM_CLASSES)
        assert jnp.allclose(out, ref, atol=1e-3, rtol=1e-3), (
            f"mismatch at B={B}: max abs err {jnp.max(jnp.abs(out - ref))}"
        )

    print("KERNEL_OK")
</pallas_src>

<mosaic_0001>
module attributes {stable_mosaic.version = 11 : i64} {
  func.func @fc1_kernel(%arg0: i32, %arg1: memref<8x1024xf32, #tpu.memory_space<vmem>>, %arg2: memref<1024x128xbf16, #tpu.memory_space<vmem>>, %arg3: memref<1x128xf32, #tpu.memory_space<vmem>>, %arg4: memref<128x128xf32, #tpu.memory_space<vmem>>, %arg5: memref<1x128xf32, #tpu.memory_space<vmem>>, %arg6: memref<8x128xf32, #tpu.memory_space<vmem>>) attributes {dimension_semantics = [#tpu.dimension_semantics<parallel>], iteration_bounds = array<i64: 1>, scalar_prefetch = 0 : i64, scratch_operands = 0 : i64, tpu.core_type = #tpu.core_type<tc>, window_params = [{transform_indices = @transform_0, window_bounds = array<i64: 8, 1024>}, {pipeline_mode = #tpu.pipeline_mode<synchronous>, transform_indices = @transform_1, window_bounds = array<i64: 1024, 128>}, {pipeline_mode = #tpu.pipeline_mode<synchronous>, transform_indices = @transform_2, window_bounds = array<i64: 1, 128>}, {pipeline_mode = #tpu.pipeline_mode<synchronous>, transform_indices = @transform_3, window_bounds = array<i64: 128, 128>}, {pipeline_mode = #tpu.pipeline_mode<synchronous>, transform_indices = @transform_4, window_bounds = array<i64: 1, 128>}, {transform_indices = @transform_5, window_bounds = array<i64: 8, 128>}]} {
    %c0 = arith.constant 0 : index
    %c0_0 = arith.constant 0 : index
    %0 = vector.load %arg1[%c0, %c0_0] : memref<8x1024xf32, #tpu.memory_space<vmem>>, vector<8x1024xf32>
    %1 = arith.truncf %0 : vector<8x1024xf32> to vector<8x1024xbf16>
    %c0_1 = arith.constant 0 : index
    %c0_2 = arith.constant 0 : index
    %2 = vector.load %arg2[%c0_1, %c0_2] : memref<1024x128xbf16, #tpu.memory_space<vmem>>, vector<1024x128xbf16>
    %cst = arith.constant dense<0.000000e+00> : vector<8x128xf32>
    %3 = tpu.matmul %1, %2, %cst {dimension_numbers = #tpu.dot_dimension_numbers<[1], [0], [0], [1], [0, 0, 1, 1], [], []>} : vector<8x1024xbf16>, vector<1024x128xbf16>, vector<8x128xf32> -> vector<8x128xf32>
    %c0_3 = arith.constant 0 : index
    %c0_4 = arith.constant 0 : index
    %4 = vector.load %arg3[%c0_3, %c0_4] : memref<1x128xf32, #tpu.memory_space<vmem>>, vector<1x128xf32>
    %5 = vector.broadcast %4 : vector<1x128xf32> to vector<8x128xf32>
    %6 = arith.addf %3, %5 : vector<8x128xf32>
    %cst_5 = arith.constant 0.000000e+00 : f32
    %7 = vector.broadcast %cst_5 : f32 to vector<8x128xf32>
    %8 = arith.maximumf %6, %7 : vector<8x128xf32>
    %c0_6 = arith.constant 0 : index
    %c0_7 = arith.constant 0 : index
    %9 = vector.load %arg4[%c0_6, %c0_7] : memref<128x128xf32, #tpu.memory_space<vmem>>, vector<128x128xf32>
    %cst_8 = arith.constant dense<0.000000e+00> : vector<8x128xf32>
    %10 = tpu.matmul %8, %9, %cst_8 {dimension_numbers = #tpu.dot_dimension_numbers<[1], [0], [0], [1], [0, 0, 1, 1], [], []>} : vector<8x128xf32>, vector<128x128xf32>, vector<8x128xf32> -> vector<8x128xf32>
    %c0_9 = arith.constant 0 : index
    %c0_10 = arith.constant 0 : index
    %11 = vector.load %arg5[%c0_9, %c0_10] : memref<1x128xf32, #tpu.memory_space<vmem>>, vector<1x128xf32>
    %12 = vector.broadcast %11 : vector<1x128xf32> to vector<8x128xf32>
    %13 = arith.addf %10, %12 : vector<8x128xf32>
    %c0_11 = arith.constant 0 : index
    %c0_12 = arith.constant 0 : index
    %14 = vector.load %arg6[%c0_11, %c0_12] : memref<8x128xf32, #tpu.memory_space<vmem>>, vector<8x128xf32>
    tpu.vector_store %arg6[%c0_11, %c0_12], %13 {strides = array<i32>} : memref<8x128xf32, #tpu.memory_space<vmem>>, vector<8x128xf32>,
    return
  }
  func.func @transform_0(%arg0: i32) -> (i32, i32) {
    %c0_i32 = arith.constant 0 : i32
    %c0_i32_0 = arith.constant 0 : i32
    return %arg0, %c0_i32 : i32, i32
  }
  func.func @transform_1(%arg0: i32) -> (i32, i32) {
    %c0_i32 = arith.constant 0 : i32
    %c0_i32_0 = arith.constant 0 : i32
    %c0_i32_1 = arith.constant 0 : i32
    return %c0_i32, %c0_i32_0 : i32, i32
  }
  func.func @transform_2(%arg0: i32) -> (i32, i32) {
    %c0_i32 = arith.constant 0 : i32
    %c0_i32_0 = arith.constant 0 : i32
    %c0_i32_1 = arith.constant 0 : i32
    return %c0_i32, %c0_i32_0 : i32, i32
  }
  func.func @transform_3(%arg0: i32) -> (i32, i32) {
    %c0_i32 = arith.constant 0 : i32
    %c0_i32_0 = arith.constant 0 : i32
    %c0_i32_1 = arith.constant 0 : i32
    return %c0_i32, %c0_i32_0 : i32, i32
  }
  func.func @transform_4(%arg0: i32) -> (i32, i32) {
    %c0_i32 = arith.constant 0 : i32
    %c0_i32_0 = arith.constant 0 : i32
    %c0_i32_1 = arith.constant 0 : i32
    return %c0_i32, %c0_i32_0 : i32, i32
  }
  func.func @transform_5(%arg0: i32) -> (i32, i32) {
    %c0_i32 = arith.constant 0 : i32
    %c0_i32_0 = arith.constant 0 : i32
    return %arg0, %c0_i32 : i32, i32
  }
}

</mosaic_0001>

<llo_original>
// kernel: fc1_forward.1
$region0: #{fc1_forward.1}
  #allocation0 [shape = 'u32[]', space=smem, size = 0x4, offset = 0x4, fixed_abs, tag = 'smem constant byte address 0x4 - core index']
  #allocation1 [shape = 'u32[144,128]{1,0:T(1,128)}', space=vmem, size = 0x12000, scoped, tag = 'internal scratch']
  %s0 = inlined_call_operand.vmem [shape: f32[8,1024], index: 0, kind: input, shape index: {}]
  %s1 = inlined_call_operand.hbm [shape: bf16[1024,128], index: 1, kind: input, shape index: {}]
  %s2 = inlined_call_operand.vmem [shape: f32[1,128], index: 2, kind: input, shape index: {}]
  %s3 = inlined_call_operand.vmem [shape: f32[128,128], index: 3, kind: input, shape index: {}]
  %s4 = inlined_call_operand.vmem [shape: f32[1,128], index: 4, kind: input, shape index: {}]
  %s5 = inlined_call_operand.vmem [shape: f32[8,128], index: 5, kind: output, shape index: {}]
  %s6 = sld [smem:[#allocation0]]
  $region34: #{fc1_forward.1} parent=0
    _
  %s8 = ssub.s32 1, %s6
  %s9 = scalar_select 0, %s8, %s6
  $region1: #{fc1_forward.1} parent=0
    #allocation2 [shape = 'u8[262144]{0}', space=vmem, size = 0x40000, scoped, tag = 'input window, operand 1, single buffered']
    #allocation3 [shape = 's32[1]{0}', space=sflag, size = 0x4, scoped, tag = 'scoped memory for fc1_forward.1']
    %10 = vsyncpa [#allocation3], 0
    // Predicated region
    $region2: #{fc1_forward.1} parent=1 // pred_check
      _
    $region3: #{fc1_forward.1} parent=1 // pred_check_branch
      %12 = sbr.rel (0) target = $region5
    $region4: #{fc1_forward.1} parent=1 // pred_region
      _
    $region5: #{fc1_forward.1} parent=1 // pred_fallthru
      _
    // Predicated region
    $region6: #{fc1_forward.1} parent=1 // pred_check
      _
    $region7: #{fc1_forward.1} parent=1 // pred_check_branch
      %14 = sbr.rel (0) target = $region9
    $region8: #{fc1_forward.1} parent=1 // pred_region
      %s16 = ssub.s32 8192, 8192
      %17 = vsyncadd [#allocation3], %s16
      %s18 = sshll.u32 [#allocation2], 4
      %s19 = int_to_ptr.vmem [resolvable:$true] %s18
      %24 = dma.hbm_to_vmem [thread:$0]  %s1, 8192, %s19, [#allocation3], 64, 64, 4
    $region9: #{fc1_forward.1} parent=1 // pred_fallthru
      _
    // Predicated region
    $region10: #{fc1_forward.1} parent=1 // pred_check
      _
    $region11: #{fc1_forward.1} parent=1 // pred_check_branch
      %26 = sbr.rel (0) target = $region13
    $region12: #{fc1_forward.1} parent=1 // pred_region
      _
    $region13: #{fc1_forward.1} parent=1 // pred_fallthru
      _
    // Predicated region
    $region14: #{fc1_forward.1} parent=1 // pred_check
      _
    $region15: #{fc1_forward.1} parent=1 // pred_check_branch
      %28 = sbr.rel (0) target = $region17
    $region16: #{fc1_forward.1} parent=1 // pred_region
      _
    $region17: #{fc1_forward.1} parent=1 // pred_fallthru
      _
    // Predicated region
    $region18: #{fc1_forward.1} parent=1 // pred_check
      _
    $region19: #{fc1_forward.1} parent=1 // pred_check_branch
      %30 = sbr.rel (0) target = $region21
    $region20: #{fc1_forward.1} parent=1 // pred_region
      _
    $region21: #{fc1_forward.1} parent=1 // pred_fallthru
      _
    // Predicated region
    $region22: #{fc1_forward.1} parent=1 // pred_check
      _
    $region23: #{fc1_forward.1} parent=1 // pred_check_branch
      %32 = sbr.rel (0) target = $region25
    $region24: #{fc1_forward.1} parent=1 // pred_region
      %33 = dma.done [#allocation3], 8192
    $region25: #{fc1_forward.1} parent=1 // pred_fallthru
      _
    %v35 = vld [vmem:[%s0] sm:$0xff]
    %v36 = vld [vmem:[%s0 + $0x8] sm:$0xff]
    %v37 = vld [vmem:[%s0 + $0x10] sm:$0xff]
    %v38 = vld [vmem:[%s0 + $0x18] sm:$0xff]
    %v39 = vld [vmem:[%s0 + $0x20] sm:$0xff]
    %v40 = vld [vmem:[%s0 + $0x28] sm:$0xff]
    %v41 = vld [vmem:[%s0 + $0x30] sm:$0xff]
    %v42 = vld [vmem:[%s0 + $0x38] sm:$0xff]
    %v43 = vpack.c.bf16 %v35, %v35
    %v44 = vpack.c.bf16 %v36, %v36
    %v45 = vpack.c.bf16 %v37, %v37
    %v46 = vpack.c.bf16 %v38, %v38
    %v47 = vpack.c.bf16 %v39, %v39
    %v48 = vpack.c.bf16 %v40, %v40
    %v49 = vpack.c.bf16 %v41, %v41
    %v50 = vpack.c.bf16 %v42, %v42
    %v51 = vld [vmem:[#allocation2] sm:$0xf]
    %v52 = vld [vmem:[#allocation2 + $0x4] sm:$0xf]
    %v53 = vld [vmem:[#allocation2 + $0x8] sm:$0xf]
    %v54 = vld [vmem:[#allocation2 + $0xc] sm:$0xf]
    %v55 = vld [vmem:[#allocation2 + $0x10] sm:$0xf]
    %v56 = vld [vmem:[#allocation2 + $0x14] sm:$0xf]
    %v57 = vld [vmem:[#allocation2 + $0x18] sm:$0xf]
    %v58 = vld [vmem:[#allocation2 + $0x1c] sm:$0xf]
    %v59 = vld [vmem:[#allocation2 + $0x20] sm:$0xf]
    %v60 = vld [vmem:[#allocation2 + $0x24] sm:$0xf]
    %v61 = vld [vmem:[#allocation2 + $0x28] sm:$0xf]
    %v62 = vld [vmem:[#allocation2 + $0x2c] sm:$0xf]
    %v63 = vld [vmem:[#allocation2 + $0x30] sm:$0xf]
    %v64 = vld [vmem:[#allocation2 + $0x34] sm:$0xf]
    %v65 = vld [vmem:[#allocation2 + $0x38] sm:$0xf]
    %v66 = vld [vmem:[#allocation2 + $0x3c] sm:$0xf]
    %v67 = vld [vmem:[#allocation2 + $0x40] sm:$0xf]
    %v68 = vld [vmem:[#allocation2 + $0x44] sm:$0xf]
    %v69 = vld [vmem:[#allocation2 + $0x48] sm:$0xf]
    %v70 = vld [vmem:[#allocation2 + $0x4c] sm:$0xf]
    %v71 = vld [vmem:[#allocation2 + $0x50] sm:$0xf]
    %v72 = vld [vmem:[#allocation2 + $0x54] sm:$0xf]
    %v73 = vld [vmem:[#allocation2 + $0x58] sm:$0xf]
    %v74 = vld [vmem:[#allocation2 + $0x5c] sm:$0xf]
    %v75 = vld [vmem:[#allocation2 + $0x60] sm:$0xf]
    %v76 = vld [vmem:[#allocation2 + $0x64] sm:$0xf]
    %v77 = vld [vmem:[#allocation2 + $0x68] sm:$0xf]
    %v78 = vld [vmem:[#allocation2 + $0x6c] sm:$0xf]
    %v79 = vld [vmem:[#allocation2 + $0x70] sm:$0xf]
    %v80 = vld [vmem:[#allocation2 + $0x74] sm:$0xf]
    %v81 = vld [vmem:[#allocation2 + $0x78] sm:$0xf]
    %v82 = vld [vmem:[#allocation2 + $0x7c] sm:$0xf]
    %v83 = vld [vmem:[#allocation2 + $0x80] sm:$0xf]
    %v84 = vld [vmem:[#allocation2 + $0x84] sm:$0xf]
    %v85 = vld [vmem:[#allocation2 + $0x88] sm:$0xf]
    %v86 = vld [vmem:[#allocation2 + $0x8c] sm:$0xf]
    %v87 = vld [vmem:[#allocation2 + $0x90] sm:$0xf]
    %v88 = vld [vmem:[#allocation2 + $0x94] sm:$0xf]
    %v89 = vld [vmem:[#allocation2 + $0x98] sm:$0xf]
    %v90 = vld [vmem:[#allocation2 + $0x9c] sm:$0xf]
    %v91 = vld [vmem:[#allocation2 + $0xa0] sm:$0xf]
    %v92 = vld [vmem:[#allocation2 + $0xa4] sm:$0xf]
    %v93 = vld [vmem:[#allocation2 + $0xa8] sm:$0xf]
    %v94 = vld [vmem:[#allocation2 + $0xac] sm:$0xf]
    %v95 = vld [vmem:[#allocation2 + $0xb0] sm:$0xf]
    %v96 = vld [vmem:[#allocation2 + $0xb4] sm:$0xf]
    %v97 = vld [vmem:[#allocation2 + $0xb8] sm:$0xf]
    %v98 = vld [vmem:[#allocation2 + $0xbc] sm:$0xf]
    %v99 = vld [vmem:[#allocation2 + $0xc0] sm:$0xf]
    %v100 = vld [vmem:[#allocation2 + $0xc4] sm:$0xf]
    %v101 = vld [vmem:[#allocation2 + $0xc8] sm:$0xf]
    %v102 = vld [vmem:[#allocation2 + $0xcc] sm:$0xf]
    %v103 = vld [vmem:[#allocation2 + $0xd0] sm:$0xf]
    %v104 = vld [vmem:[#allocation2 + $0xd4] sm:$0xf]
    %v105 = vld [vmem:[#allocation2 + $0xd8] sm:$0xf]
    %v106 = vld [vmem:[#allocation2 + $0xdc] sm:$0xf]
    %v107 = vld [vmem:[#allocation2 + $0xe0] sm:$0xf]
    %v108 = vld [vmem:[#allocation2 + $0xe4] sm:$0xf]
    %v109 = vld [vmem:[#allocation2 + $0xe8] sm:$0xf]
    %v110 = vld [vmem:[#allocation2 + $0xec] sm:$0xf]
    %v111 = vld [vmem:[#allocation2 + $0xf0] sm:$0xf]
    %v112 = vld [vmem:[#allocation2 + $0xf4] sm:$0xf]
    %v113 = vld [vmem:[#allocation2 + $0xf8] sm:$0xf]
    %v114 = vld [vmem:[#allocation2 + $0xfc] sm:$0xf]
    %v115 = vld [vmem:[#allocation2 + $0x100] sm:$0xf]
    %v116 = vld [vmem:[#allocation2 + $0x104] sm:$0xf]
    %v117 = vld [vmem:[#allocation2 + $0x108] sm:$0xf]
    %v118 = vld [vmem:[#allocation2 + $0x10c] sm:$0xf]
    %v119 = vld [vmem:[#allocation2 + $0x110] sm:$0xf]
    %v120 = vld [vmem:[#allocation2 + $0x114] sm:$0xf]
    %v121 = vld [vmem:[#allocation2 + $0x118] sm:$0xf]
    %v122 = vld [vmem:[#allocation2 + $0x11c] sm:$0xf]
    %v123 = vld [vmem:[#allocation2 + $0x120] sm:$0xf]
    %v124 = vld [vmem:[#allocation2 + $0x124] sm:$0xf]
    %v125 = vld [vmem:[#allocation2 + $0x128] sm:$0xf]
    %v126 = vld [vmem:[#allocation2 + $0x12c] sm:$0xf]
    %v127 = vld [vmem:[#allocation2 + $0x130] sm:$0xf]
    %v128 = vld [vmem:[#allocation2 + $0x134] sm:$0xf]
    %v129 = vld [vmem:[#allocation2 + $0x138] sm:$0xf]
    %v130 = vld [vmem:[#allocation2 + $0x13c] sm:$0xf]
    %v131 = vld [vmem:[#allocation2 + $0x140] sm:$0xf]
    %v132 = vld [vmem:[#allocation2 + $0x144] sm:$0xf]
    %v133 = vld [vmem:[#allocation2 + $0x148] sm:$0xf]
    %v134 = vld [vmem:[#allocation2 + $0x14c] sm:$0xf]
    %v135 = vld [vmem:[#allocation2 + $0x150] sm:$0xf]
    %v136 = vld [vmem:[#allocation2 + $0x154] sm:$0xf]
    %v137 = vld [vmem:[#allocation2 + $0x158] sm:$0xf]
    %v138 = vld [vmem:[#allocation2 + $0x15c] sm:$0xf]
    %v139 = vld [vmem:[#allocation2 + $0x160] sm:$0xf]
    %v140 = vld [vmem:[#allocation2 + $0x164] sm:$0xf]
    %v141 = vld [vmem:[#allocation2 + $0x168] sm:$0xf]
    %v142 = vld [vmem:[#allocation2 + $0x16c] sm:$0xf]
    %v143 = vld [vmem:[#allocation2 + $0x170] sm:$0xf]
    %v144 = vld [vmem:[#allocation2 + $0x174] sm:$0xf]
    %v145 = vld [vmem:[#allocation2 + $0x178] sm:$0xf]
    %v146 = vld [vmem:[#allocation2 + $0x17c] sm:$0xf]
    %v147 = vld [vmem:[#allocation2 + $0x180] sm:$0xf]
    %v148 = vld [vmem:[#allocation2 + $0x184] sm:$0xf]
    %v149 = vld [vmem:[#allocation2 + $0x188] sm:$0xf]
    %v150 = vld [vmem:[#allocation2 + $0x18c] sm:$0xf]
    %v151 = vld [vmem:[#allocation2 + $0x190] sm:$0xf]
    %v152 = vld [vmem:[#allocation2 + $0x194] sm:$0xf]
    %v153 = vld [vmem:[#allocation2 + $0x198] sm:$0xf]
    %v154 = vld [vmem:[#allocation2 + $0x19c] sm:$0xf]
    %v155 = vld [vmem:[#allocation2 + $0x1a0] sm:$0xf]
    %v156 = vld [vmem:[#allocation2 + $0x1a4] sm:$0xf]
    %v157 = vld [vmem:[#allocation2 + $0x1a8] sm:$0xf]
    %v158 = vld [vmem:[#allocation2 + $0x1ac] sm:$0xf]
    %v159 = vld [vmem:[#allocation2 + $0x1b0] sm:$0xf]
    %v160 = vld [vmem:[#allocation2 + $0x1b4] sm:$0xf]
    %v161 = vld [vmem:[#allocation2 + $0x1b8] sm:$0xf]
    %v162 = vld [vmem:[#allocation2 + $0x1bc] sm:$0xf]
    %v163 = vld [vmem:[#allocation2 + $0x1c0] sm:$0xf]
    %v164 = vld [vmem:[#allocation2 + $0x1c4] sm:$0xf]
    %v165 = vld [vmem:[#allocation2 + $0x1c8] sm:$0xf]
    %v166 = vld [vmem:[#allocation2 + $0x1cc] sm:$0xf]
    %v167 = vld [vmem:[#allocation2 + $0x1d0] sm:$0xf]
    %v168 = vld [vmem:[#allocation2 + $0x1d4] sm:$0xf]
    %v169 = vld [vmem:[#allocation2 + $0x1d8] sm:$0xf]
    %v170 = vld [vmem:[#allocation2 + $0x1dc] sm:$0xf]
    %v171 = vld [vmem:[#allocation2 + $0x1e0] sm:$0xf]
    %v172 = vld [vmem:[#allocation2 + $0x1e4] sm:$0xf]
    %v173 = vld [vmem:[#allocation2 + $0x1e8] sm:$0xf]
    %v174 = vld [vmem:[#allocation2 + $0x1ec] sm:$0xf]
    %v175 = vld [vmem:[#allocation2 + $0x1f0] sm:$0xf]
    %v176 = vld [vmem:[#allocation2 + $0x1f4] sm:$0xf]
    %v177 = vld [vmem:[#allocation2 + $0x1f8] sm:$0xf]
    %v178 = vld [vmem:[#allocation2 + $0x1fc] sm:$0xf]
    %v179 = vld [vmem:[%s2] sm:$0x1]
    %v181 = vlaneseq
    %v182 = vshrl.u32 %v181, 7
    %v183 = vsub.s32 0, %v182
    %v184 = vrot.slane %v179, %v183
    %v314 = vunpack.c.l.b16 %v51
    %v315 = vunpack.c.l.b16 %v52
    %v316 = vunpack.c.l.b16 %v53
    %v317 = vunpack.c.l.b16 %v54
    %v318 = vunpack.c.l.b16 %v55
    %v319 = vunpack.c.l.b16 %v56
    %v320 = vunpack.c.l.b16 %v57
    %v321 = vunpack.c.l.b16 %v58
    %v322 = vunpack.c.l.b16 %v59
    %v323 = vunpack.c.l.b16 %v60
    %v324 = vunpack.c.l.b16 %v61
    %v325 = vunpack.c.l.b16 %v62
    %v326 = vunpack.c.l.b16 %v63
    %v327 = vunpack.c.l.b16 %v64
    %v328 = vunpack.c.l.b16 %v65
    %v329 = vunpack.c.l.b16 %v66
    %v330 = vunpack.c.l.b16 %v67
    %v331 = vunpack.c.l.b16 %v68
    %v332 = vunpack.c.l.b16 %v69
    %v333 = vunpack.c.l.b16 %v70
    %v334 = vunpack.c.l.b16 %v71
    %v335 = vunpack.c.l.b16 %v72
    %v336 = vunpack.c.l.b16 %v73
    %v337 = vunpack.c.l.b16 %v74
    %v338 = vunpack.c.l.b16 %v75
    %v339 = vunpack.c.l.b16 %v76
    %v340 = vunpack.c.l.b16 %v77
    %v341 = vunpack.c.l.b16 %v78
    %v342 = vunpack.c.l.b16 %v79
    %v343 = vunpack.c.l.b16 %v80
    %v344 = vunpack.c.l.b16 %v81
    %v345 = vunpack.c.l.b16 %v82
    %v346 = vunpack.c.l.b16 %v83
    %v347 = vunpack.c.l.b16 %v84
    %v348 = vunpack.c.l.b16 %v85
    %v349 = vunpack.c.l.b16 %v86
    %v350 = vunpack.c.l.b16 %v87
    %v351 = vunpack.c.l.b16 %v88
    %v352 = vunpack.c.l.b16 %v89
    %v353 = vunpack.c.l.b16 %v90
    %v354 = vunpack.c.l.b16 %v91
    %v355 = vunpack.c.l.b16 %v92
    %v356 = vunpack.c.l.b16 %v93
    %v357 = vunpack.c.l.b16 %v94
    %v358 = vunpack.c.l.b16 %v95
    %v359 = vunpack.c.l.b16 %v96
    %v360 = vunpack.c.l.b16 %v97
    %v361 = vunpack.c.l.b16 %v98
    %v362 = vunpack.c.l.b16 %v99
    %v363 = vunpack.c.l.b16 %v100
    %v364 = vunpack.c.l.b16 %v101
    %v365 = vunpack.c.l.b16 %v102
    %v366 = vunpack.c.l.b16 %v103
    %v367 = vunpack.c.l.b16 %v104
    %v368 = vunpack.c.l.b16 %v105
    %v369 = vunpack.c.l.b16 %v106
    %v370 = vunpack.c.l.b16 %v107
    %v371 = vunpack.c.l.b16 %v108
    %v372 = vunpack.c.l.b16 %v109
    %v373 = vunpack.c.l.b16 %v110
    %v374 = vunpack.c.l.b16 %v111
    %v375 = vunpack.c.l.b16 %v112
    %v376 = vunpack.c.l.b16 %v113
    %v377 = vunpack.c.l.b16 %v114
    %v378 = vunpack.c.l.b16 %v115
    %v379 = vunpack.c.l.b16 %v116
    %v380 = vunpack.c.l.b16 %v117
    %v381 = vunpack.c.l.b16 %v118
    %v382 = vunpack.c.l.b16 %v119
    %v383 = vunpack.c.l.b16 %v120
    %v384 = vunpack.c.l.b16 %v121
    %v385 = vunpack.c.l.b16 %v122
    %v386 = vunpack.c.l.b16 %v123
    %v387 = vunpack.c.l.b16 %v124
    %v388 = vunpack.c.l.b16 %v125
    %v389 = vunpack.c.l.b16 %v126
    %v390 = vunpack.c.l.b16 %v127
    %v391 = vunpack.c.l.b16 %v128
    %v392 = vunpack.c.l.b16 %v129
    %v393 = vunpack.c.l.b16 %v130
    %v394 = vunpack.c.l.b16 %v131
    %v395 = vunpack.c.l.b16 %v132
    %v396 = vunpack.c.l.b16 %v133
    %v397 = vunpack.c.l.b16 %v134
    %v398 = vunpack.c.l.b16 %v135
    %v399 = vunpack.c.l.b16 %v136
    %v400 = vunpack.c.l.b16 %v137
    %v401 = vunpack.c.l.b16 %v138
    %v402 = vunpack.c.l.b16 %v139
    %v403 = vunpack.c.l.b16 %v140
    %v404 = vunpack.c.l.b16 %v141
    %v405 = vunpack.c.l.b16 %v142
    %v406 = vunpack.c.l.b16 %v143
    %v407 = vunpack.c.l.b16 %v144
    %v408 = vunpack.c.l.b16 %v145
    %v409 = vunpack.c.l.b16 %v146
    %v410 = vunpack.c.l.b16 %v147
    %v411 = vunpack.c.l.b16 %v148
    %v412 = vunpack.c.l.b16 %v149
    %v413 = vunpack.c.l.b16 %v150
    %v414 = vunpack.c.l.b16 %v151
    %v415 = vunpack.c.l.b16 %v152
    %v416 = vunpack.c.l.b16 %v153
    %v417 = vunpack.c.l.b16 %v154
    %v418 = vunpack.c.l.b16 %v155
    %v419 = vunpack.c.l.b16 %v156
    %v420 = vunpack.c.l.b16 %v157
    %v421 = vunpack.c.l.b16 %v158
    %v422 = vunpack.c.l.b16 %v159
    %v423 = vunpack.c.l.b16 %v160
    %v424 = vunpack.c.l.b16 %v161
    %v425 = vunpack.c.l.b16 %v162
    %v426 = vunpack.c.l.b16 %v163
    %v427 = vunpack.c.l.b16 %v164
    %v428 = vunpack.c.l.b16 %v165
    %v429 = vunpack.c.l.b16 %v166
    %v430 = vunpack.c.l.b16 %v167
    %v431 = vunpack.c.l.b16 %v168
    %v432 = vunpack.c.l.b16 %v169
    %v433 = vunpack.c.l.b16 %v170
    %v434 = vunpack.c.l.b16 %v171
    %v435 = vunpack.c.l.b16 %v172
    %v436 = vunpack.c.l.b16 %v173
    %v437 = vunpack.c.l.b16 %v174
    %v438 = vunpack.c.l.b16 %v175
    %v439 = vunpack.c.l.b16 %v176
    %v440 = vunpack.c.l.b16 %v177
    %v441 = vunpack.c.l.b16 %v178
    %v442 = vpack.c.b16 %v315, %v314
    %v443 = vpack.c.b16 %v317, %v316
    %v444 = vpack.c.b16 %v319, %v318
    %v445 = vpack.c.b16 %v321, %v320
    %v446 = vpack.c.b16 %v323, %v322
    %v447 = vpack.c.b16 %v325, %v324
    %v448 = vpack.c.b16 %v327, %v326
    %v449 = vpack.c.b16 %v329, %v328
    %v450 = vpack.c.b16 %v331, %v330
    %v451 = vpack.c.b16 %v333, %v332
    %v452 = vpack.c.b16 %v335, %v334
    %v453 = vpack.c.b16 %v337, %v336
    %v454 = vpack.c.b16 %v339, %v338
    %v455 = vpack.c.b16 %v341, %v340
    %v456 = vpack.c.b16 %v343, %v342
    %v457 = vpack.c.b16 %v345, %v344
    %v458 = vpack.c.b16 %v347, %v346
    %v459 = vpack.c.b16 %v349, %v348
    %v460 = vpack.c.b16 %v351, %v350
    %v461 = vpack.c.b16 %v353, %v352
    %v462 = vpack.c.b16 %v355, %v354
    %v463 = vpack.c.b16 %v357, %v356
    %v464 = vpack.c.b16 %v359, %v358
    %v465 = vpack.c.b16 %v361, %v360
    %v466 = vpack.c.b16 %v363, %v362
    %v467 = vpack.c.b16 %v365, %v364
    %v468 = vpack.c.b16 %v367, %v366
    %v469 = vpack.c.b16 %v369, %v368
    %v470 = vpack.c.b16 %v371, %v370
    %v471 = vpack.c.b16 %v373, %v372
    %v472 = vpack.c.b16 %v375, %v374
    %v473 = vpack.c.b16 %v377, %v376
    %v474 = vpack.c.b16 %v379, %v378
    %v475 = vpack.c.b16 %v381, %v380
    %v476 = vpack.c.b16 %v383, %v382
    %v477 = vpack.c.b16 %v385, %v384
    %v478 = vpack.c.b16 %v387, %v386
    %v479 = vpack.c.b16 %v389, %v388
    %v480 = vpack.c.b16 %v391, %v390
    %v481 = vpack.c.b16 %v393, %v392
    %v482 = vpack.c.b16 %v395, %v394
    %v483 = vpack.c.b16 %v397, %v396
    %v484 = vpack.c.b16 %v399, %v398
    %v485 = vpack.c.b16 %v401, %v400
    %v486 = vpack.c.b16 %v403, %v402
    %v487 = vpack.c.b16 %v405, %v404
    %v488 = vpack.c.b16 %v407, %v406
    %v489 = vpack.c.b16 %v409, %v408
    %v490 = vpack.c.b16 %v411, %v410
    %v491 = vpack.c.b16 %v413, %v412
    %v492 = vpack.c.b16 %v415, %v414
    %v493 = vpack.c.b16 %v417, %v416
    %v494 = vpack.c.b16 %v419, %v418
    %v495 = vpack.c.b16 %v421, %v420
    %v496 = vpack.c.b16 %v423, %v422
    %v497 = vpack.c.b16 %v425, %v424
    %v498 = vpack.c.b16 %v427, %v426
    %v499 = vpack.c.b16 %v429, %v428
    %v500 = vpack.c.b16 %v431, %v430
    %v501 = vpack.c.b16 %v433, %v432
    %v502 = vpack.c.b16 %v435, %v434
    %v503 = vpack.c.b16 %v437, %v436
    %v504 = vpack.c.b16 %v439, %v438
    %v505 = vpack.c.b16 %v441, %v440
    %570 = vmatprep.subr.bf16.mxu0 0
    %571 = vmatpush1.bf16.msra.mxu0 %v442
    %572 = vmatprep.subr.bf16.mxu0 0
    %573 = vmatpush1.bf16.msra.mxu0 %v443
    %574 = vmatprep.subr.bf16.mxu0 0
    %575 = vmatpush1.bf16.msra.mxu0 %v444
    %576 = vmatprep.subr.bf16.mxu0 0
    %577 = vmatpush1.bf16.msra.mxu0 %v445
    %578 = vmatprep.subr.bf16.mxu0 0
    %579 = vmatpush1.bf16.msra.mxu0 %v446
    %580 = vmatprep.subr.bf16.mxu0 0
    %581 = vmatpush1.bf16.msra.mxu0 %v447
    %582 = vmatprep.subr.bf16.mxu0 0
    %583 = vmatpush1.bf16.msra.mxu0 %v448
    %584 = vmatprep.subr.bf16.mxu0 0
    %585 = vmatpush1.bf16.msra.mxu0 %v449
    %586 = vmatprep.subr.bf16.mxu0 0
    %587 = vmatpush1.bf16.msra.mxu0 %v450
    %588 = vmatprep.subr.bf16.mxu0 0
    %589 = vmatpush1.bf16.msra.mxu0 %v451
    %590 = vmatprep.subr.bf16.mxu0 0
    %591 = vmatpush1.bf16.msra.mxu0 %v452
    %592 = vmatprep.subr.bf16.mxu0 0
    %593 = vmatpush1.bf16.msra.mxu0 %v453
    %594 = vmatprep.subr.bf16.mxu0 0
    %595 = vmatpush1.bf16.msra.mxu0 %v454
    %596 = vmatprep.subr.bf16.mxu0 0
    %597 = vmatpush1.bf16.msra.mxu0 %v455
    %598 = vmatprep.subr.bf16.mxu0 0
    %599 = vmatpush1.bf16.msra.mxu0 %v456
    %600 = vmatprep.subr.bf16.mxu0 0
    %601 = vmatpush1.bf16.msra.mxu0 %v457
    %602 = vmatprep.mubr.bf16.mxu0 %v44
    %603 = vmatmul.mubr.bf16.gmra.mrb[0].mxu0 %v43
    %v604 = vpop.f32.mrb[0].mxu0
    %v605 = vadd.f32 %v184, %v604
    %v606 = vpop.f32.mrb[0].mxu0
    %v607 = vpop.f32.mrb[0].mxu0
    %v608 = vpop.f32.mrb[0].mxu0
    %609 = vdwg.mxu0
    %610 = vmatprep.subr.bf16.mxu0 0
    %611 = vmatpush1.bf16.msra.mxu0 %v458
    %612 = vmatprep.subr.bf16.mxu0 0
    %613 = vmatpush1.bf16.msra.mxu0 %v459
    %614 = vmatprep.subr.bf16.mxu0 0
    %615 = vmatpush1.bf16.msra.mxu0 %v460
    %616 = vmatprep.subr.bf16.mxu0 0
    %617 = vmatpush1.bf16.msra.mxu0 %v461
    %618 = vmatprep.subr.bf16.mxu0 0
    %619 = vmatpush1.bf16.msra.mxu0 %v462
    %620 = vmatprep.subr.bf16.mxu0 0
    %621 = vmatpush1.bf16.msra.mxu0 %v463
    %622 = vmatprep.subr.bf16.mxu0 0
    %623 = vmatpush1.bf16.msra.mxu0 %v464
    %624 = vmatprep.subr.bf16.mxu0 0
    %625 = vmatpush1.bf16.msra.mxu0 %v465
    %626 = vmatprep.subr.bf16.mxu0 0
    %627 = vmatpush1.bf16.msra.mxu0 %v466
    %628 = vmatprep.subr.bf16.mxu0 0
    %629 = vmatpush1.bf16.msra.mxu0 %v467
    %630 = vmatprep.subr.bf16.mxu0 0
    %631 = vmatpush1.bf16.msra.mxu0 %v468
    %632 = vmatprep.subr.bf16.mxu0 0
    %633 = vmatpush1.bf16.msra.mxu0 %v469
    %634 = vmatprep.subr.bf16.mxu0 0
    %635 = vmatpush1.bf16.msra.mxu0 %v470
    %636 = vmatprep.subr.bf16.mxu0 0
    %637 = vmatpush1.bf16.msra.mxu0 %v471
    %638 = vmatprep.subr.bf16.mxu0 0
    %639 = vmatpush1.bf16.msra.mxu0 %v472
    %640 = vmatprep.subr.bf16.mxu0 0
    %641 = vmatpush1.bf16.msra.mxu0 %v473
    %642 = vmatprep.mubr.bf16.mxu0 %v46
    %643 = vmatmul.mubr.bf16.gmra.mrb[0].mxu0 %v45
    %v644 = vpop.f32.mrb[0].mxu0
    %v645 = vadd.f32 %v605, %v644
    %v646 = vpop.f32.mrb[0].mxu0
    %v647 = vpop.f32.mrb[0].mxu0
    %v648 = vpop.f32.mrb[0].mxu0
    %649 = vdwg.mxu0
    %650 = vmatprep.subr.bf16.mxu0 0
    %651 = vmatpush1.bf16.msra.mxu0 %v474
    %652 = vmatprep.subr.bf16.mxu0 0
    %653 = vmatpush1.bf16.msra.mxu0 %v475
    %654 = vmatprep.subr.bf16.mxu0 0
    %655 = vmatpush1.bf16.msra.mxu0 %v476
    %656 = vmatprep.subr.bf16.mxu0 0
    %657 = vmatpush1.bf16.msra.mxu0 %v477
    %658 = vmatprep.subr.bf16.mxu0 0
    %659 = vmatpush1.bf16.msra.mxu0 %v478
    %660 = vmatprep.subr.bf16.mxu0 0
    %661 = vmatpush1.bf16.msra.mxu0 %v479
    %662 = vmatprep.subr.bf16.mxu0 0
    %663 = vmatpush1.bf16.msra.mxu0 %v480
    %664 = vmatprep.subr.bf16.mxu0 0
    %665 = vmatpush1.bf16.msra.mxu0 %v481
    %666 = vmatprep.subr.bf16.mxu0 0
    %667 = vmatpush1.bf16.msra.mxu0 %v482
    %668 = vmatprep.subr.bf16.mxu0 0
    %669 = vmatpush1.bf16.msra.mxu0 %v483
    %670 = vmatprep.subr.bf16.mxu0 0
    %671 = vmatpush1.bf16.msra.mxu0 %v484
    %672 = vmatprep.subr.bf16.mxu0 0
    %673 = vmatpush1.bf16.msra.mxu0 %v485
    %674 = vmatprep.subr.bf16.mxu0 0
    %675 = vmatpush1.bf16.msra.mxu0 %v486
    %676 = vmatprep.subr.bf16.mxu0 0
    %677 = vmatpush1.bf16.msra.mxu0 %v487
    %678 = vmatprep.subr.bf16.mxu0 0
    %679 = vmatpush1.bf16.msra.mxu0 %v488
    %680 = vmatprep.subr.bf16.mxu0 0
    %681 = vmatpush1.bf16.msra.mxu0 %v489
    %682 = vmatprep.mubr.bf16.mxu0 %v48
    %683 = vmatmul.mubr.bf16.gmra.mrb[0].mxu0 %v47
    %v684 = vpop.f32.mrb[0].mxu0
    %v685 = vadd.f32 %v645, %v684
    %v686 = vpop.f32.mrb[0].mxu0
    %v687 = vpop.f32.mrb[0].mxu0
    %v688 = vpop.f32.mrb[0].mxu0
    %689 = vdwg.mxu0
    %690 = vmatprep.subr.bf16.mxu0 0
    %691 = vmatpush1.bf16.msra.mxu0 %v490
    %692 = vmatprep.subr.bf16.mxu0 0
    %693 = vmatpush1.bf16.msra.mxu0 %v491
    %694 = vmatprep.subr.bf16.mxu0 0
    %695 = vmatpush1.bf16.msra.mxu0 %v492
    %696 = vmatprep.subr.bf16.mxu0 0
    %697 = vmatpush1.bf16.msra.mxu0 %v493
    %698 = vmatprep.subr.bf16.mxu0 0
    %699 = vmatpush1.bf16.msra.mxu0 %v494
    %700 = vmatprep.subr.bf16.mxu0 0
    %701 = vmatpush1.bf16.msra.mxu0 %v495
    %702 = vmatprep.subr.bf16.mxu0 0
    %703 = vmatpush1.bf16.msra.mxu0 %v496
    %704 = vmatprep.subr.bf16.mxu0 0
    %705 = vmatpush1.bf16.msra.mxu0 %v497
    %706 = vmatprep.subr.bf16.mxu0 0
    %707 = vmatpush1.bf16.msra.mxu0 %v498
    %708 = vmatprep.subr.bf16.mxu0 0
    %709 = vmatpush1.bf16.msra.mxu0 %v499
    %710 = vmatprep.subr.bf16.mxu0 0
    %711 = vmatpush1.bf16.msra.mxu0 %v500
    %712 = vmatprep.subr.bf16.mxu0 0
    %713 = vmatpush1.bf16.msra.mxu0 %v501
    %714 = vmatprep.subr.bf16.mxu0 0
    %715 = vmatpush1.bf16.msra.mxu0 %v502
    %716 = vmatprep.subr.bf16.mxu0 0
    %717 = vmatpush1.bf16.msra.mxu0 %v503
    %718 = vmatprep.subr.bf16.mxu0 0
    %719 = vmatpush1.bf16.msra.mxu0 %v504
    %720 = vmatprep.subr.bf16.mxu0 0
    %721 = vmatpush1.bf16.msra.mxu0 %v505
    %722 = vmatprep.mubr.bf16.mxu0 %v50
    %723 = vmatmul.mubr.bf16.gmra.mrb[0].mxu0 %v49
    %v724 = vpop.f32.mrb[0].mxu0
    %v725 = vadd.f32 %v685, %v724
    %v726 = vpop.f32.mrb[0].mxu0
    %v727 = vpop.f32.mrb[0].mxu0
    %v728 = vpop.f32.mrb[0].mxu0
    %729 = vdwg.mxu0
    %v730 = vmax.f32 %v725, 0.0
    %v731 = vld [vmem:[%s3] sm:$0xff]
    %v732 = vld [vmem:[%s3 + $0x8] sm:$0xff]
    %v733 = vld [vmem:[%s3 + $0x10] sm:$0xff]
    %v734 = vld [vmem:[%s3 + $0x18] sm:$0xff]
    %v735 = vld [vmem:[%s3 + $0x20] sm:$0xff]
    %v736 = vld [vmem:[%s3 + $0x28] sm:$0xff]
    %v737 = vld [vmem:[%s3 + $0x30] sm:$0xff]
    %v738 = vld [vmem:[%s3 + $0x38] sm:$0xff]
    %v739 = vld [vmem:[%s3 + $0x40] sm:$0xff]
    %v740 = vld [vmem:[%s3 + $0x48] sm:$0xff]
    %v741 = vld [vmem:[%s3 + $0x50] sm:$0xff]
    %v742 = vld [vmem:[%s3 + $0x58] sm:$0xff]
    %v743 = vld [vmem:[%s3 + $0x60] sm:$0xff]
    %v744 = vld [vmem:[%s3 + $0x68] sm:$0xff]
    %v745 = vld [vmem:[%s3 + $0x70] sm:$0xff]
    %v746 = vld [vmem:[%s3 + $0x78] sm:$0xff]
    %v747 = vld [vmem:[%s4] sm:$0x1]
    %v749 = vlaneseq
    %v750 = vshrl.u32 %v749, 7
    %v751 = vsub.s32 0, %v750
    %v752 = vrot.slane %v747, %v751
    %754 = vmatprep.subr.mxu0 0.0
    %755 = vmatpush1.msra.mxu0 %v731
    %756 = vmatprep.subr.mxu0 0.0
    %757 = vmatpush1.msra.mxu0 %v732
    %758 = vmatprep.subr.mxu0 0.0
    %759 = vmatpush1.msra.mxu0 %v733
    %760 = vmatprep.subr.mxu0 0.0
    %761 = vmatpush1.msra.mxu0 %v734
    %762 = vmatprep.subr.mxu0 0.0
    %763 = vmatpush1.msra.mxu0 %v735
    %764 = vmatprep.subr.mxu0 0.0
    %765 = vmatpush1.msra.mxu0 %v736
    %766 = vmatprep.subr.mxu0 0.0
    %767 = vmatpush1.msra.mxu0 %v737
    %768 = vmatprep.subr.mxu0 0.0
    %769 = vmatpush1.msra.mxu0 %v738
    %770 = vmatprep.subr.mxu0 0.0
    %771 = vmatpush1.msra.mxu0 %v739
    %772 = vmatprep.subr.mxu0 0.0
    %773 = vmatpush1.msra.mxu0 %v740
    %774 = vmatprep.subr.mxu0 0.0
    %775 = vmatpush1.msra.mxu0 %v741
    %776 = vmatprep.subr.mxu0 0.0
    %777 = vmatpush1.msra.mxu0 %v742
    %778 = vmatprep.subr.mxu0 0.0
    %779 = vmatpush1.msra.mxu0 %v743
    %780 = vmatprep.subr.mxu0 0.0
    %781 = vmatpush1.msra.mxu0 %v744
    %782 = vmatprep.subr.mxu0 0.0
    %783 = vmatpush1.msra.mxu0 %v745
    %784 = vmatprep.subr.mxu0 0.0
    %785 = vmatpush1.msra.mxu0 %v746
    %786 = vmatprep.subr.mxu0 0.0
    %787 = vmatpush1.msra.mxu0 0.0
    %788 = vmatprep.subr.mxu0 0.0
    %789 = vmatpush1.msra.mxu0 0.0
    %790 = vmatprep.subr.mxu0 0.0
    %791 = vmatpush1.msra.mxu0 0.0
    %792 = vmatprep.subr.mxu0 0.0
    %793 = vmatpush1.msra.mxu0 0.0
    %794 = vmatprep.subr.mxu0 0.0
    %795 = vmatpush1.msra.mxu0 0.0
    %796 = vmatprep.subr.mxu0 0.0
    %797 = vmatpush1.msra.mxu0 0.0
    %798 = vmatprep.subr.mxu0 0.0
    %799 = vmatpush1.msra.mxu0 0.0
    %800 = vmatprep.subr.mxu0 0.0
    %801 = vmatpush1.msra.mxu0 0.0
    %802 = vmatprep.subr.mxu0 0.0
    %803 = vmatpush1.msra.mxu0 0.0
    %804 = vmatprep.subr.mxu0 0.0
    %805 = vmatpush1.msra.mxu0 0.0
    %806 = vmatprep.subr.mxu0 0.0
    %807 = vmatpush1.msra.mxu0 0.0
    %808 = vmatprep.subr.mxu0 0.0
    %809 = vmatpush1.msra.mxu0 0.0
    %810 = vmatprep.subr.mxu0 0.0
    %811 = vmatpush1.msra.mxu0 0.0
    %812 = vmatprep.subr.mxu0 0.0
    %813 = vmatpush1.msra.mxu0 0.0
    %814 = vmatprep.subr.mxu0 0.0
    %815 = vmatpush1.msra.mxu0 0.0
    %816 = vmatprep.subr.mxu0 0.0
    %817 = vmatpush1.msra.mxu0 0.0
    %818 = vmatprep.mubr.f32.mxu0 0.0
    %819 = vmatmul.mubr.f32.gmra.mrb[0].mxu0 %v730
    %v820 = vpop.f32.mrb[0].mxu0
    %v821 = vadd.f32 %v752, %v820
    %v822 = vpop.f32.mrb[0].mxu0
    %823 = vdwg.mxu0
    %824 = vst [vmem:[%s5] sm:$0xff] %v821
    // Predicated region
    $region26: #{fc1_forward.1} parent=1 // pred_check
      _
    $region27: #{fc1_forward.1} parent=1 // pred_check_branch
      %826 = sbr.rel (0) target = $region29
    $region28: #{fc1_forward.1} parent=1 // pred_region
      _
    $region29: #{fc1_forward.1} parent=1 // pred_fallthru
      _
    // Predicated region
    $region30: #{fc1_forward.1} parent=1 // pred_check
      _
    $region31: #{fc1_forward.1} parent=1 // pred_check_branch
      %828 = sbr.rel (0) target = $region33
    $region32: #{fc1_forward.1} parent=1 // pred_region
      _
    $region33: #{fc1_forward.1} parent=1 // pred_fallthru
      _
    %829 = vsyncpa [#allocation3], 1

</llo_original>
